<compile_context>
chip_gen: v7x
topology: tpu7x:2x2x1
jax: 0.10.0
libtpu: 0.0.40
codegen_flags: <defaults>
</compile_context>

<pallas_src>
import functools

import jax
import jax.numpy as jnp
from jax.experimental import pallas as pl
from jax.experimental.pallas import tpu as pltpu  # noqa: F401  (TPU backend)


# ----------------------------------------------------------------------------
# Fused kernel: batched input projection -> unrolled tanh recurrence (values
# only on the serial chain) -> fc projection -> mean cross-entropy.
# Weights are pre-transposed to (in, out) layout and zero-padded to Hp/Vp
# (multiples of 128) by the wrapper.
# ----------------------------------------------------------------------------
def fused_rnn_kernel(x_ref, wih_ref, whh_ref, bias_ref, wf_ref, bf_ref, y_ref,
                     logits_ref, loss_ref, *, B, T, V):
    Hp = whh_ref.shape[0]
    Vp = wf_ref.shape[1]
    mxu_dtype = wih_ref.dtype          # f32, or bf16 (all TPU generations)

    # (1) Input projection for ALL timesteps in one matmul (M = T*B, not B),
    #     with the (b_ih + b_hh) bias broadcast hoisted out of the time loop.
    #     x_ref is time-major (row = t*B + b) so each recurrence step below
    #     consumes a CONTIGUOUS (B, Hp) row block of this value.
    xproj = jnp.dot(x_ref[...], wih_ref[...],
                    preferred_element_type=jnp.float32) + bias_ref[...]

    # (2) Serial recurrence, fully unrolled (T static & small).  Only the
    #     h_prev @ W_hh^T matmul + tanh remain on the serial dependency chain;
    #     all per-step operands/results live in vregs, not scratch refs.
    whh = whh_ref[...]
    h = jnp.zeros((B, Hp), jnp.float32)
    hs = []
    for t in range(T):
        xp_t = xproj[t * B:(t + 1) * B, :]               # contiguous value slice
        hh = jnp.dot(h.astype(mxu_dtype), whh,
                     preferred_element_type=jnp.float32)
        h = jnp.tanh(xp_t + hh)
        hs.append(h)

    # Batch the hidden-state writes: one stack after the loop (off the serial
    # chain) yields the batch-major (B, T, Hp) slab used by fc and the output.
    h_all = jnp.stack(hs, axis=1)                        # (B, T, Hp)

    # (3) Fused fc + mean cross-entropy over the whole (B*T, Vp) slab.
    h_flat = h_all.reshape(B * T, Hp).astype(mxu_dtype)
    logits = jnp.dot(h_flat, wf_ref[...],
                     preferred_element_type=jnp.float32) + bf_ref[...]
    logits_ref[...] = logits.reshape(B, T, Vp)           # lane-dense store

    col = jax.lax.broadcasted_iota(jnp.int32, (B * T, Vp), 1)
    # Single masking pass; padded vocab columns -> -inf before the logsumexp.
    # 'masked' is reused for the target term: targets are guaranteed < V, so
    # masked == logits at every target column (logits stay f32, so -1e30 is
    # safe).
    masked = jnp.where(col < V, logits, jnp.float32(-1e30))
    m = jnp.max(masked, axis=-1, keepdims=True)
    lse = jnp.log(jnp.sum(jnp.exp(masked - m), axis=-1, keepdims=True)) + m
    tgt = jnp.sum(jnp.where(col == y_ref[...], masked, 0.0),
                  axis=-1, keepdims=True)
    loss_ref[...] = jnp.mean(lse - tgt, keepdims=True)   # (1, 1)


# ----------------------------------------------------------------------------
# One-time parameter prep OUTSIDE jit: transpose weights to (in, out) layout,
# zero-pad H/V up to multiples of 128, pre-sum the two RNN biases, and cast
# MXU operands (including the embedding table, so gathered activations arrive
# in the MXU dtype) to the requested matmul dtype.  bf16 is a valid lever on
# v5e as well as v6e/v7x; elementwise math and the hidden state stay f32.
# TODO(synk): at real H/V, pad to 256 on v6e/v7x to fill the 256x256 MXU.
# ----------------------------------------------------------------------------
def _round_up(x, m):
    return ((x + m - 1) // m) * m


def _pad_to(a, shape):
    return jnp.pad(a, [(0, s - d) for d, s in zip(a.shape, shape)])


def prepare_params(params, mxu_dtype=jnp.float32):
    wih, whh = params["w_ih"], params["w_hh"]         # (H, E), (H, H)
    bih, bhh = params["b_ih"], params["b_hh"]         # (H,), (H,)
    wf, bf = params["w_fc"], params["b_fc"]           # (V, H), (V,)
    H, E = wih.shape
    V = wf.shape[0]
    Hp, Vp = _round_up(H, 128), _round_up(V, 128)
    return {
        "embedding": params["embedding"].astype(mxu_dtype),
        "w_ih_t": _pad_to(wih.T, (E, Hp)).astype(mxu_dtype),
        "w_hh_t": _pad_to(whh.T, (Hp, Hp)).astype(mxu_dtype),
        "bias": _pad_to((bih + bhh).reshape(1, H), (1, Hp)).astype(jnp.float32),
        "w_fc_t": _pad_to(wf.T, (Hp, Vp)).astype(mxu_dtype),
        "b_fc": _pad_to(bf.reshape(1, V), (1, Vp)).astype(jnp.float32),
    }


# ----------------------------------------------------------------------------
# Forward wrapper.  Only glue here: time-major embedding gather (so each
# recurrence step reads a contiguous row block) + flatten + final slice of
# the zero-padded vocab columns.  Logits come back already batch-major.
# ----------------------------------------------------------------------------
@functools.partial(jax.jit, static_argnames=("vocab_size",))
def vanilla_rnn_forward(x_tokens, y_tokens, prepped, *, vocab_size):
    B, T = x_tokens.shape
    Vp = prepped["w_fc_t"].shape[1]

    # Embedding gather kept as XLA glue; time-major row order (t*B + b).
    x_tm = jnp.take(prepped["embedding"], x_tokens.T.reshape(-1), axis=0)
    y_flat = y_tokens.reshape(B * T, 1).astype(jnp.int32)   # batch-major

    kernel = functools.partial(fused_rnn_kernel, B=B, T=T, V=vocab_size)
    logits_p, loss = pl.pallas_call(
        kernel,
        out_shape=(
            jax.ShapeDtypeStruct((B, T, Vp), jnp.float32),
            jax.ShapeDtypeStruct((1, 1), jnp.float32),
        ),
    )(x_tm, prepped["w_ih_t"], prepped["w_hh_t"], prepped["bias"],
      prepped["w_fc_t"], prepped["b_fc"], y_flat)

    # Drop the zero-padded vocab columns (kernel stores are lane-dense Vp).
    return logits_p[..., :vocab_size], loss[0, 0]


# ----------------------------------------------------------------------------
# Pure-JAX reference (matches PyTorch semantics) for the correctness check.
# ----------------------------------------------------------------------------
def reference_forward(x_tokens, y_tokens, params):
    emb, wih, whh = params["embedding"], params["w_ih"], params["w_hh"]
    bih, bhh, wf, bf = params["b_ih"], params["b_hh"], params["w_fc"], params["b_fc"]
    x = jnp.take(emb, x_tokens, axis=0)        # (B, T, E)
    B, T, _ = x.shape
    H = whh.shape[0]
    h = jnp.zeros((B, H), jnp.float32)
    outs = []
    for t in range(T):
        h = jnp.tanh(x[:, t] @ wih.T + bih + h @ whh.T + bhh)
        outs.append(h)
    out = jnp.stack(outs, axis=1)              # (B, T, H)
    logits = out @ wf.T + bf                   # (B, T, V)
    logp = jax.nn.log_softmax(logits, axis=-1)
    nll = -jnp.take_along_axis(logp, y_tokens[..., None], axis=-1)[..., 0]
    return logits, jnp.mean(nll)


if __name__ == "__main__":
    # Small, shape-consistent config: vocab=64, embed=16, hidden=32, B=2, T=8.
    V, E, H = 64, 16, 32
    B, T = 2, 8

    key = jax.random.PRNGKey(0)
    keys = jax.random.split(key, 9)
    s = 1.0 / jnp.sqrt(H)
    params = {
        "embedding": jax.random.normal(keys[0], (V, E), jnp.float32),
        "w_ih": jax.random.uniform(keys[1], (H, E), jnp.float32, -s, s),
        "w_hh": jax.random.uniform(keys[2], (H, H), jnp.float32, -s, s),
        "b_ih": jax.random.uniform(keys[3], (H,), jnp.float32, -s, s),
        "b_hh": jax.random.uniform(keys[4], (H,), jnp.float32, -s, s),
        "w_fc": jax.random.uniform(keys[5], (V, H), jnp.float32, -s, s),
        "b_fc": jax.random.uniform(keys[6], (V,), jnp.float32, -s, s),
    }
    x_tokens = jax.random.randint(keys[7], (B, T), 0, V, dtype=jnp.int32)
    y_tokens = jax.random.randint(keys[8], (B, T), 0, V, dtype=jnp.int32)

    ref_logits, ref_loss = reference_forward(x_tokens, y_tokens, params)

    # f32 MXU operands: faithful to the f32 PyTorch module.
    prepped_f32 = prepare_params(params, mxu_dtype=jnp.float32)
    logits, loss = vanilla_rnn_forward(x_tokens, y_tokens, prepped_f32,
                                       vocab_size=V)
    jax.block_until_ready((logits, loss))
    assert logits.shape == (B, T, V)
    assert jnp.allclose(logits, ref_logits, atol=1e-4, rtol=1e-4)
    assert jnp.allclose(loss, ref_loss, atol=1e-4, rtol=1e-4)

    # bf16 MXU operands (valid on v5e/v6e/v7x): f32 accumulation + f32 hidden
    # state keep it close to the f32 reference; checked at a loose tolerance.
    prepped_bf16 = prepare_params(params, mxu_dtype=jnp.bfloat16)
    logits_bf, loss_bf = vanilla_rnn_forward(x_tokens, y_tokens, prepped_bf16,
                                             vocab_size=V)
    jax.block_until_ready((logits_bf, loss_bf))
    assert jnp.allclose(logits_bf, ref_logits, atol=5e-2, rtol=5e-2)
    assert jnp.allclose(loss_bf, ref_loss, atol=5e-2, rtol=5e-2)

    print("KERNEL_OK")
</pallas_src>

<mosaic_0001>
module attributes {stable_mosaic.version = 11 : i64} {
  func.func @fused_rnn_kernel(%arg0: memref<16x16xf32, #tpu.memory_space<vmem>>, %arg1: memref<16x128xf32, #tpu.memory_space<vmem>>, %arg2: memref<128x128xf32, #tpu.memory_space<vmem>>, %arg3: memref<1x128xf32, #tpu.memory_space<vmem>>, %arg4: memref<128x128xf32, #tpu.memory_space<vmem>>, %arg5: memref<1x128xf32, #tpu.memory_space<vmem>>, %arg6: memref<16x1xi32, #tpu.memory_space<vmem>>, %arg7: memref<2x8x128xf32, #tpu.memory_space<vmem>>, %arg8: memref<1x1xf32, #tpu.memory_space<vmem>>) attributes {dimension_semantics = [], scalar_prefetch = 0 : i64, scratch_operands = 0 : i64, tpu.core_type = #tpu.core_type<tc>} {
    %c0 = arith.constant 0 : index
    %c0_0 = arith.constant 0 : index
    %0 = vector.load %arg0[%c0, %c0_0] : memref<16x16xf32, #tpu.memory_space<vmem>>, vector<16x16xf32>
    %c0_1 = arith.constant 0 : index
    %c0_2 = arith.constant 0 : index
    %1 = vector.load %arg1[%c0_1, %c0_2] : memref<16x128xf32, #tpu.memory_space<vmem>>, vector<16x128xf32>
    %cst = arith.constant dense<0.000000e+00> : vector<16x128xf32>
    %2 = tpu.matmul %0, %1, %cst {dimension_numbers = #tpu.dot_dimension_numbers<[1], [0], [0], [1], [0, 0, 1, 1], [], []>} : vector<16x16xf32>, vector<16x128xf32>, vector<16x128xf32> -> vector<16x128xf32>
    %c0_3 = arith.constant 0 : index
    %c0_4 = arith.constant 0 : index
    %3 = vector.load %arg3[%c0_3, %c0_4] : memref<1x128xf32, #tpu.memory_space<vmem>>, vector<1x128xf32>
    %4 = vector.broadcast %3 : vector<1x128xf32> to vector<16x128xf32>
    %5 = arith.addf %2, %4 : vector<16x128xf32>
    %c0_5 = arith.constant 0 : index
    %c0_6 = arith.constant 0 : index
    %6 = vector.load %arg2[%c0_5, %c0_6] : memref<128x128xf32, #tpu.memory_space<vmem>>, vector<128x128xf32>
    %cst_7 = arith.constant 0.000000e+00 : f32
    %7 = vector.broadcast %cst_7 : f32 to vector<2x128xf32>
    %8 = vector.extract_strided_slice %5 {offsets = [0, 0], sizes = [2, 128], strides = [1, 1]} : vector<16x128xf32> to vector<2x128xf32>
    %cst_8 = arith.constant dense<0.000000e+00> : vector<2x128xf32>
    %9 = tpu.matmul %7, %6, %cst_8 {dimension_numbers = #tpu.dot_dimension_numbers<[1], [0], [0], [1], [0, 0, 1, 1], [], []>} : vector<2x128xf32>, vector<128x128xf32>, vector<2x128xf32> -> vector<2x128xf32>
    %10 = arith.addf %8, %9 : vector<2x128xf32>
    %11 = math.tanh %10 : vector<2x128xf32>
    %12 = vector.extract_strided_slice %5 {offsets = [2, 0], sizes = [2, 128], strides = [1, 1]} : vector<16x128xf32> to vector<2x128xf32>
    %cst_9 = arith.constant dense<0.000000e+00> : vector<2x128xf32>
    %13 = tpu.matmul %11, %6, %cst_9 {dimension_numbers = #tpu.dot_dimension_numbers<[1], [0], [0], [1], [0, 0, 1, 1], [], []>} : vector<2x128xf32>, vector<128x128xf32>, vector<2x128xf32> -> vector<2x128xf32>
    %14 = arith.addf %12, %13 : vector<2x128xf32>
    %15 = math.tanh %14 : vector<2x128xf32>
    %16 = vector.extract_strided_slice %5 {offsets = [4, 0], sizes = [2, 128], strides = [1, 1]} : vector<16x128xf32> to vector<2x128xf32>
    %cst_10 = arith.constant dense<0.000000e+00> : vector<2x128xf32>
    %17 = tpu.matmul %15, %6, %cst_10 {dimension_numbers = #tpu.dot_dimension_numbers<[1], [0], [0], [1], [0, 0, 1, 1], [], []>} : vector<2x128xf32>, vector<128x128xf32>, vector<2x128xf32> -> vector<2x128xf32>
    %18 = arith.addf %16, %17 : vector<2x128xf32>
    %19 = math.tanh %18 : vector<2x128xf32>
    %20 = vector.extract_strided_slice %5 {offsets = [6, 0], sizes = [2, 128], strides = [1, 1]} : vector<16x128xf32> to vector<2x128xf32>
    %cst_11 = arith.constant dense<0.000000e+00> : vector<2x128xf32>
    %21 = tpu.matmul %19, %6, %cst_11 {dimension_numbers = #tpu.dot_dimension_numbers<[1], [0], [0], [1], [0, 0, 1, 1], [], []>} : vector<2x128xf32>, vector<128x128xf32>, vector<2x128xf32> -> vector<2x128xf32>
    %22 = arith.addf %20, %21 : vector<2x128xf32>
    %23 = math.tanh %22 : vector<2x128xf32>
    %24 = vector.extract_strided_slice %5 {offsets = [8, 0], sizes = [2, 128], strides = [1, 1]} : vector<16x128xf32> to vector<2x128xf32>
    %cst_12 = arith.constant dense<0.000000e+00> : vector<2x128xf32>
    %25 = tpu.matmul %23, %6, %cst_12 {dimension_numbers = #tpu.dot_dimension_numbers<[1], [0], [0], [1], [0, 0, 1, 1], [], []>} : vector<2x128xf32>, vector<128x128xf32>, vector<2x128xf32> -> vector<2x128xf32>
    %26 = arith.addf %24, %25 : vector<2x128xf32>
    %27 = math.tanh %26 : vector<2x128xf32>
    %28 = vector.extract_strided_slice %5 {offsets = [10, 0], sizes = [2, 128], strides = [1, 1]} : vector<16x128xf32> to vector<2x128xf32>
    %cst_13 = arith.constant dense<0.000000e+00> : vector<2x128xf32>
    %29 = tpu.matmul %27, %6, %cst_13 {dimension_numbers = #tpu.dot_dimension_numbers<[1], [0], [0], [1], [0, 0, 1, 1], [], []>} : vector<2x128xf32>, vector<128x128xf32>, vector<2x128xf32> -> vector<2x128xf32>
    %30 = arith.addf %28, %29 : vector<2x128xf32>
    %31 = math.tanh %30 : vector<2x128xf32>
    %32 = vector.extract_strided_slice %5 {offsets = [12, 0], sizes = [2, 128], strides = [1, 1]} : vector<16x128xf32> to vector<2x128xf32>
    %cst_14 = arith.constant dense<0.000000e+00> : vector<2x128xf32>
    %33 = tpu.matmul %31, %6, %cst_14 {dimension_numbers = #tpu.dot_dimension_numbers<[1], [0], [0], [1], [0, 0, 1, 1], [], []>} : vector<2x128xf32>, vector<128x128xf32>, vector<2x128xf32> -> vector<2x128xf32>
    %34 = arith.addf %32, %33 : vector<2x128xf32>
    %35 = math.tanh %34 : vector<2x128xf32>
    %36 = vector.extract_strided_slice %5 {offsets = [14, 0], sizes = [2, 128], strides = [1, 1]} : vector<16x128xf32> to vector<2x128xf32>
    %cst_15 = arith.constant dense<0.000000e+00> : vector<2x128xf32>
    %37 = tpu.matmul %35, %6, %cst_15 {dimension_numbers = #tpu.dot_dimension_numbers<[1], [0], [0], [1], [0, 0, 1, 1], [], []>} : vector<2x128xf32>, vector<128x128xf32>, vector<2x128xf32> -> vector<2x128xf32>
    %38 = arith.addf %36, %37 : vector<2x128xf32>
    %39 = math.tanh %38 : vector<2x128xf32>
    %40 = vector.shape_cast %11 : vector<2x128xf32> to vector<2x1x128xf32>
    %41 = vector.shape_cast %15 : vector<2x128xf32> to vector<2x1x128xf32>
    %42 = vector.shape_cast %19 : vector<2x128xf32> to vector<2x1x128xf32>
    %43 = vector.shape_cast %23 : vector<2x128xf32> to vector<2x1x128xf32>
    %44 = vector.shape_cast %27 : vector<2x128xf32> to vector<2x1x128xf32>
    %45 = vector.shape_cast %31 : vector<2x128xf32> to vector<2x1x128xf32>
    %46 = vector.shape_cast %35 : vector<2x128xf32> to vector<2x1x128xf32>
    %47 = vector.shape_cast %39 : vector<2x128xf32> to vector<2x1x128xf32>
    %48 = tpu.concatenate %40, %41, %42, %43, %44, %45, %46, %47 in 1 : vector<2x1x128xf32>, vector<2x1x128xf32>, vector<2x1x128xf32>, vector<2x1x128xf32>, vector<2x1x128xf32>, vector<2x1x128xf32>, vector<2x1x128xf32>, vector<2x1x128xf32> -> vector<2x8x128xf32>
    %49 = vector.shape_cast %48 : vector<2x8x128xf32> to vector<16x128xf32>
    %c0_16 = arith.constant 0 : index
    %c0_17 = arith.constant 0 : index
    %50 = vector.load %arg4[%c0_16, %c0_17] : memref<128x128xf32, #tpu.memory_space<vmem>>, vector<128x128xf32>
    %cst_18 = arith.constant dense<0.000000e+00> : vector<16x128xf32>
    %51 = tpu.matmul %49, %50, %cst_18 {dimension_numbers = #tpu.dot_dimension_numbers<[1], [0], [0], [1], [0, 0, 1, 1], [], []>} : vector<16x128xf32>, vector<128x128xf32>, vector<16x128xf32> -> vector<16x128xf32>
    %c0_19 = arith.constant 0 : index
    %c0_20 = arith.constant 0 : index
    %52 = vector.load %arg5[%c0_19, %c0_20] : memref<1x128xf32, #tpu.memory_space<vmem>>, vector<1x128xf32>
    %53 = vector.broadcast %52 : vector<1x128xf32> to vector<16x128xf32>
    %54 = arith.addf %51, %53 : vector<16x128xf32>
    %55 = vector.shape_cast %54 : vector<16x128xf32> to vector<2x8x128xf32>
    %c0_21 = arith.constant 0 : index
    %c0_22 = arith.constant 0 : index
    %c0_23 = arith.constant 0 : index
    %56 = vector.load %arg7[%c0_21, %c0_22, %c0_23] : memref<2x8x128xf32, #tpu.memory_space<vmem>>, vector<2x8x128xf32>
    tpu.vector_store %arg7[%c0_21, %c0_22, %c0_23], %55 {strides = array<i32>} : memref<2x8x128xf32, #tpu.memory_space<vmem>>, vector<2x8x128xf32>,
    %57 = tpu.iota {dimensions = array<i32: 1>} : vector<16x128xi32>
    %c64_i32 = arith.constant 64 : i32
    %58 = vector.broadcast %c64_i32 : i32 to vector<16x128xi32>
    %59 = arith.cmpi slt, %57, %58 : vector<16x128xi32>
    %cst_24 = arith.constant -1.000000e+30 : f32
    %60 = vector.broadcast %cst_24 : f32 to vector<16x128xf32>
    %61 = arith.select %59, %54, %60 : vector<16x128xi1>, vector<16x128xf32>
    %cst_25 = arith.constant dense<0xFF800000> : vector<16xf32>
    %62 = vector.multi_reduction <maximumf>, %61, %cst_25 [1] : vector<16x128xf32> to vector<16xf32>
    %63 = vector.shape_cast %62 : vector<16xf32> to vector<16x1xf32>
    %64 = vector.broadcast %63 : vector<16x1xf32> to vector<16x128xf32>
    %65 = arith.subf %61, %64 : vector<16x128xf32>
    %66 = math.exp %65 : vector<16x128xf32>
    %cst_26 = arith.constant dense<0.000000e+00> : vector<16xf32>
    %67 = vector.multi_reduction <add>, %66, %cst_26 [1] : vector<16x128xf32> to vector<16xf32>
    %68 = vector.shape_cast %67 : vector<16xf32> to vector<16x1xf32>
    %69 = math.log %68 : vector<16x1xf32>
    %70 = arith.addf %69, %63 : vector<16x1xf32>
    %c0_27 = arith.constant 0 : index
    %c0_28 = arith.constant 0 : index
    %71 = vector.load %arg6[%c0_27, %c0_28] : memref<16x1xi32, #tpu.memory_space<vmem>>, vector<16x1xi32>
    %72 = vector.broadcast %71 : vector<16x1xi32> to vector<16x128xi32>
    %73 = arith.cmpi eq, %57, %72 : vector<16x128xi32>
    %cst_29 = arith.constant 0.000000e+00 : f32
    %74 = vector.broadcast %cst_29 : f32 to vector<16x128xf32>
    %75 = arith.select %73, %61, %74 : vector<16x128xi1>, vector<16x128xf32>
    %cst_30 = arith.constant dense<0.000000e+00> : vector<16xf32>
    %76 = vector.multi_reduction <add>, %75, %cst_30 [1] : vector<16x128xf32> to vector<16xf32>
    %77 = vector.shape_cast %76 : vector<16xf32> to vector<16x1xf32>
    %78 = arith.subf %70, %77 : vector<16x1xf32>
    %79 = vector.shape_cast %78 : vector<16x1xf32> to vector<1x16x1xf32>
    %cst_31 = arith.constant dense<0.000000e+00> : vector<1xf32>
    %80 = vector.multi_reduction <add>, %79, %cst_31 [1, 2] : vector<1x16x1xf32> to vector<1xf32>
    %81 = vector.shape_cast %80 : vector<1xf32> to vector<1x1x1xf32>
    %82 = vector.extract %81[0, 0, 0] : f32 from vector<1x1x1xf32>
    %83 = vector.broadcast %82 : f32 to vector<1x1xf32>
    %cst_32 = arith.constant 1.600000e+01 : f32
    %84 = vector.broadcast %cst_32 : f32 to vector<1x1xf32>
    %85 = arith.divf %83, %84 : vector<1x1xf32>
    %c0_33 = arith.constant 0 : index
    %c0_34 = arith.constant 0 : index
    %86 = vector.load %arg8[%c0_33, %c0_34] : memref<1x1xf32, #tpu.memory_space<vmem>>, vector<1x1xf32>
    tpu.vector_store %arg8[%c0_33, %c0_34], %85 {strides = array<i32>} : memref<1x1xf32, #tpu.memory_space<vmem>>, vector<1x1xf32>,
    return
  }
}

</mosaic_0001>

<llo_original>
// kernel: vanilla_rnn_forward.1
$region0: #{vanilla_rnn_forward.1}
  #allocation0 [shape = 'u32[]', space=smem, size = 0x4, offset = 0x4, fixed_abs, tag = 'smem constant byte address 0x4 - core index']
  #allocation1 [shape = 'u32[144,128]{1,0:T(1,128)}', space=vmem, size = 0x12000, scoped, tag = 'internal scratch']
  %s0 = inlined_call_operand.vmem [shape: f32[16,16], index: 0, kind: input, shape index: {}]
  %s1 = inlined_call_operand.vmem [shape: f32[16,128], index: 1, kind: input, shape index: {}]
  %s2 = inlined_call_operand.vmem [shape: f32[128,128], index: 2, kind: input, shape index: {}]
  %s3 = inlined_call_operand.vmem [shape: f32[1,128], index: 3, kind: input, shape index: {}]
  %s4 = inlined_call_operand.vmem [shape: f32[128,128], index: 4, kind: input, shape index: {}]
  %s5 = inlined_call_operand.vmem [shape: f32[1,128], index: 5, kind: input, shape index: {}]
  %s6 = inlined_call_operand.vmem [shape: s32[16,1], index: 6, kind: input, shape index: {}]
  %s7 = inlined_call_operand.hbm [shape: f32[2,8,128], index: 7, kind: output, shape index: {0}]
  %s8 = inlined_call_operand.hbm [shape: f32[1,1], index: 8, kind: output, shape index: {1}]
  %9 = xla_tuple %s7, %s8
  %s10 = sld [smem:[#allocation0]]
  $region46: #{vanilla_rnn_forward.1} parent=0
    _
  %s12 = ssub.s32 1, %s10
  %s13 = scalar_select 0, %s12, %s10
  $region1: #{vanilla_rnn_forward.1} parent=0
    #allocation2 [shape = 'u8[8192]{0}', space=vmem, size = 0x2000, scoped, tag = 'output window, operand 0, single buffered']
    #allocation3 [shape = 's32[1]{0}', space=sflag, size = 0x4, scoped, tag = 'scoped memory for vanilla_rnn_forward.1']
    #allocation4 [shape = 'u8[512]{0}', space=vmem, size = 0x400, scoped, tag = 'output window, operand 1, single buffered']
    #allocation5 [shape = 's32[1]{0}', space=sflag, size = 0x4, scoped, tag = 'scoped memory for vanilla_rnn_forward.1']
    %14 = vsyncpa [#allocation3], 0
    %15 = vsyncpa [#allocation5], 0
    // Predicated region
    $region2: #{vanilla_rnn_forward.1} parent=1 // pred_check
      _
    $region3: #{vanilla_rnn_forward.1} parent=1 // pred_check_branch
      %17 = sbr.rel (0) target = $region5
    $region4: #{vanilla_rnn_forward.1} parent=1 // pred_region
      _
    $region5: #{vanilla_rnn_forward.1} parent=1 // pred_fallthru
      _
    // Predicated region
    $region6: #{vanilla_rnn_forward.1} parent=1 // pred_check
      _
    $region7: #{vanilla_rnn_forward.1} parent=1 // pred_check_branch
      %19 = sbr.rel (0) target = $region9
    $region8: #{vanilla_rnn_forward.1} parent=1 // pred_region
      _
    $region9: #{vanilla_rnn_forward.1} parent=1 // pred_fallthru
      _
    // Predicated region
    $region10: #{vanilla_rnn_forward.1} parent=1 // pred_check
      _
    $region11: #{vanilla_rnn_forward.1} parent=1 // pred_check_branch
      %21 = sbr.rel (0) target = $region13
    $region12: #{vanilla_rnn_forward.1} parent=1 // pred_region
      _
    $region13: #{vanilla_rnn_forward.1} parent=1 // pred_fallthru
      _
    // Predicated region
    $region14: #{vanilla_rnn_forward.1} parent=1 // pred_check
      _
    $region15: #{vanilla_rnn_forward.1} parent=1 // pred_check_branch
      %23 = sbr.rel (0) target = $region17
    $region16: #{vanilla_rnn_forward.1} parent=1 // pred_region
      _
    $region17: #{vanilla_rnn_forward.1} parent=1 // pred_fallthru
      _
    // Predicated region
    $region18: #{vanilla_rnn_forward.1} parent=1 // pred_check
      _
    $region19: #{vanilla_rnn_forward.1} parent=1 // pred_check_branch
      %25 = sbr.rel (0) target = $region21
    $region20: #{vanilla_rnn_forward.1} parent=1 // pred_region
      _
    $region21: #{vanilla_rnn_forward.1} parent=1 // pred_fallthru
      _
    // Predicated region
    $region22: #{vanilla_rnn_forward.1} parent=1 // pred_check
      _
    $region23: #{vanilla_rnn_forward.1} parent=1 // pred_check_branch
      %27 = sbr.rel (0) target = $region25
    $region24: #{vanilla_rnn_forward.1} parent=1 // pred_region
      _
    $region25: #{vanilla_rnn_forward.1} parent=1 // pred_fallthru
      _
    // Predicated region
    $region26: #{vanilla_rnn_forward.1} parent=1 // pred_check
      _
    $region27: #{vanilla_rnn_forward.1} parent=1 // pred_check_branch
      %29 = sbr.rel (0) target = $region29
    $region28: #{vanilla_rnn_forward.1} parent=1 // pred_region
      _
    $region29: #{vanilla_rnn_forward.1} parent=1 // pred_fallthru
      _
    %v30 = vld [vmem:[%s0] sm:$0xff]
    %v31 = vld [vmem:[%s0 + $0x8] sm:$0xff]
    %v32 = vld [vmem:[%s1] sm:$0xff]
    %v33 = vld [vmem:[%s1 + $0x8] sm:$0xff]
    %v34 = vld [vmem:[%s3] sm:$0x1]
    %v36 = vlaneseq
    %v37 = vshrl.u32 %v36, 7
    %v38 = vsub.s32 0, %v37
    %v39 = vrot.slane %v34, %v38
    %vm41 = vcmask 130048
    %v43 = vsel %vm41, %v30, 0
    %v46 = vsel %vm41, %v31, 0
    %48 = vmatprep.subr.mxu0 0.0
    %49 = vmatpush1.msra.mxu0 %v32
    %50 = vmatprep.subr.mxu0 0.0
    %51 = vmatpush1.msra.mxu0 %v33
    %52 = vmatprep.subr.mxu0 0.0
    %53 = vmatpush1.msra.mxu0 0.0
    %54 = vmatprep.subr.mxu0 0.0
    %55 = vmatpush1.msra.mxu0 0.0
    %56 = vmatprep.subr.mxu0 0.0
    %57 = vmatpush1.msra.mxu0 0.0
    %58 = vmatprep.subr.mxu0 0.0
    %59 = vmatpush1.msra.mxu0 0.0
    %60 = vmatprep.subr.mxu0 0.0
    %61 = vmatpush1.msra.mxu0 0.0
    %62 = vmatprep.subr.mxu0 0.0
    %63 = vmatpush1.msra.mxu0 0.0
    %64 = vmatprep.subr.mxu0 0.0
    %65 = vmatpush1.msra.mxu0 0.0
    %66 = vmatprep.subr.mxu0 0.0
    %67 = vmatpush1.msra.mxu0 0.0
    %68 = vmatprep.subr.mxu0 0.0
    %69 = vmatpush1.msra.mxu0 0.0
    %70 = vmatprep.subr.mxu0 0.0
    %71 = vmatpush1.msra.mxu0 0.0
    %72 = vmatprep.subr.mxu0 0.0
    %73 = vmatpush1.msra.mxu0 0.0
    %74 = vmatprep.subr.mxu0 0.0
    %75 = vmatpush1.msra.mxu0 0.0
    %76 = vmatprep.subr.mxu0 0.0
    %77 = vmatpush1.msra.mxu0 0.0
    %78 = vmatprep.subr.mxu0 0.0
    %79 = vmatpush1.msra.mxu0 0.0
    %80 = vmatprep.subr.mxu0 0.0
    %81 = vmatpush1.msra.mxu0 0.0
    %82 = vmatprep.subr.mxu0 0.0
    %83 = vmatpush1.msra.mxu0 0.0
    %84 = vmatprep.subr.mxu0 0.0
    %85 = vmatpush1.msra.mxu0 0.0
    %86 = vmatprep.subr.mxu0 0.0
    %87 = vmatpush1.msra.mxu0 0.0
    %88 = vmatprep.subr.mxu0 0.0
    %89 = vmatpush1.msra.mxu0 0.0
    %90 = vmatprep.subr.mxu0 0.0
    %91 = vmatpush1.msra.mxu0 0.0
    %92 = vmatprep.subr.mxu0 0.0
    %93 = vmatpush1.msra.mxu0 0.0
    %94 = vmatprep.subr.mxu0 0.0
    %95 = vmatpush1.msra.mxu0 0.0
    %96 = vmatprep.subr.mxu0 0.0
    %97 = vmatpush1.msra.mxu0 0.0
    %98 = vmatprep.subr.mxu0 0.0
    %99 = vmatpush1.msra.mxu0 0.0
    %100 = vmatprep.subr.mxu0 0.0
    %101 = vmatpush1.msra.mxu0 0.0
    %102 = vmatprep.subr.mxu0 0.0
    %103 = vmatpush1.msra.mxu0 0.0
    %104 = vmatprep.subr.mxu0 0.0
    %105 = vmatpush1.msra.mxu0 0.0
    %106 = vmatprep.subr.mxu0 0.0
    %107 = vmatpush1.msra.mxu0 0.0
    %108 = vmatprep.subr.mxu0 0.0
    %109 = vmatpush1.msra.mxu0 0.0
    %110 = vmatprep.subr.mxu0 0.0
    %111 = vmatpush1.msra.mxu0 0.0
    %112 = vmatprep.mubr.f32.mxu0 0.0
    %113 = vmatmul.mubr.f32.gmra.mrb[0].mxu0 %v43
    %v114 = vpop.f32.mrb[0].mxu0
    %v115 = vadd.f32 %v39, %v114
    %v116 = vpop.f32.mrb[0].mxu0
    %117 = vmatprep.mubr.f32.mxu0 0.0
    %118 = vmatmul.mubr.f32.gmra.mrb[0].mxu0 %v46
    %v119 = vpop.f32.mrb[0].mxu0
    %v120 = vadd.f32 %v39, %v119
    %v121 = vpop.f32.mrb[0].mxu0
    %122 = vdwg.mxu0
    %v123 = vld [vmem:[%s2] sm:$0xff]
    %v124 = vld [vmem:[%s2 + $0x8] sm:$0xff]
    %v125 = vld [vmem:[%s2 + $0x10] sm:$0xff]
    %v126 = vld [vmem:[%s2 + $0x18] sm:$0xff]
    %v127 = vld [vmem:[%s2 + $0x20] sm:$0xff]
    %v128 = vld [vmem:[%s2 + $0x28] sm:$0xff]
    %v129 = vld [vmem:[%s2 + $0x30] sm:$0xff]
    %v130 = vld [vmem:[%s2 + $0x38] sm:$0xff]
    %v131 = vld [vmem:[%s2 + $0x40] sm:$0xff]
    %v132 = vld [vmem:[%s2 + $0x48] sm:$0xff]
    %v133 = vld [vmem:[%s2 + $0x50] sm:$0xff]
    %v134 = vld [vmem:[%s2 + $0x58] sm:$0xff]
    %v135 = vld [vmem:[%s2 + $0x60] sm:$0xff]
    %v136 = vld [vmem:[%s2 + $0x68] sm:$0xff]
    %v137 = vld [vmem:[%s2 + $0x70] sm:$0xff]
    %v138 = vld [vmem:[%s2 + $0x78] sm:$0xff]
    %139 = vmatprep.subr.mxu0 0.0
    %140 = vmatpush1.msra.mxu0 %v123
    %141 = vmatprep.subr.mxu0 0.0
    %142 = vmatpush1.msra.mxu0 %v124
    %143 = vmatprep.subr.mxu0 0.0
    %144 = vmatpush1.msra.mxu0 %v125
    %145 = vmatprep.subr.mxu0 0.0
    %146 = vmatpush1.msra.mxu0 %v126
    %147 = vmatprep.subr.mxu0 0.0
    %148 = vmatpush1.msra.mxu0 %v127
    %149 = vmatprep.subr.mxu0 0.0
    %150 = vmatpush1.msra.mxu0 %v128
    %151 = vmatprep.subr.mxu0 0.0
    %152 = vmatpush1.msra.mxu0 %v129
    %153 = vmatprep.subr.mxu0 0.0
    %154 = vmatpush1.msra.mxu0 %v130
    %155 = vmatprep.subr.mxu0 0.0
    %156 = vmatpush1.msra.mxu0 %v131
    %157 = vmatprep.subr.mxu0 0.0
    %158 = vmatpush1.msra.mxu0 %v132
    %159 = vmatprep.subr.mxu0 0.0
    %160 = vmatpush1.msra.mxu0 %v133
    %161 = vmatprep.subr.mxu0 0.0
    %162 = vmatpush1.msra.mxu0 %v134
    %163 = vmatprep.subr.mxu0 0.0
    %164 = vmatpush1.msra.mxu0 %v135
    %165 = vmatprep.subr.mxu0 0.0
    %166 = vmatpush1.msra.mxu0 %v136
    %167 = vmatprep.subr.mxu0 0.0
    %168 = vmatpush1.msra.mxu0 %v137
    %169 = vmatprep.subr.mxu0 0.0
    %170 = vmatpush1.msra.mxu0 %v138
    %171 = vmatprep.subr.mxu0 0.0
    %172 = vmatpush1.msra.mxu0 0.0
    %173 = vmatprep.subr.mxu0 0.0
    %174 = vmatpush1.msra.mxu0 0.0
    %175 = vmatprep.subr.mxu0 0.0
    %176 = vmatpush1.msra.mxu0 0.0
    %177 = vmatprep.subr.mxu0 0.0
    %178 = vmatpush1.msra.mxu0 0.0
    %179 = vmatprep.subr.mxu0 0.0
    %180 = vmatpush1.msra.mxu0 0.0
    %181 = vmatprep.subr.mxu0 0.0
    %182 = vmatpush1.msra.mxu0 0.0
    %183 = vmatprep.subr.mxu0 0.0
    %184 = vmatpush1.msra.mxu0 0.0
    %185 = vmatprep.subr.mxu0 0.0
    %186 = vmatpush1.msra.mxu0 0.0
    %187 = vmatprep.subr.mxu0 0.0
    %188 = vmatpush1.msra.mxu0 0.0
    %189 = vmatprep.subr.mxu0 0.0
    %190 = vmatpush1.msra.mxu0 0.0
    %191 = vmatprep.subr.mxu0 0.0
    %192 = vmatpush1.msra.mxu0 0.0
    %193 = vmatprep.subr.mxu0 0.0
    %194 = vmatpush1.msra.mxu0 0.0
    %195 = vmatprep.subr.mxu0 0.0
    %196 = vmatpush1.msra.mxu0 0.0
    %197 = vmatprep.subr.mxu0 0.0
    %198 = vmatpush1.msra.mxu0 0.0
    %199 = vmatprep.subr.mxu0 0.0
    %200 = vmatpush1.msra.mxu0 0.0
    %201 = vmatprep.subr.mxu0 0.0
    %202 = vmatpush1.msra.mxu0 0.0
    %203 = vmatprep.mubr.f32.mxu0 0.0
    %204 = vmatmul.mubr.f32.gmra.mrb[0].mxu0 0.0
    %v205 = vpop.f32.mrb[0].mxu0
    %v206 = vadd.f32 0.0, %v205
    %v207 = vpop.f32.mrb[0].mxu0
    %208 = vdwg.mxu0
    %v209 = vadd.f32 %v115, %v206
    %v210 = vtanh.pop %v209
    %211 = vmatprep.subr.mxu0 0.0
    %212 = vmatpush1.msra.mxu0 %v123
    %213 = vmatprep.subr.mxu0 0.0
    %214 = vmatpush1.msra.mxu0 %v124
    %215 = vmatprep.subr.mxu0 0.0
    %216 = vmatpush1.msra.mxu0 %v125
    %217 = vmatprep.subr.mxu0 0.0
    %218 = vmatpush1.msra.mxu0 %v126
    %219 = vmatprep.subr.mxu0 0.0
    %220 = vmatpush1.msra.mxu0 %v127
    %221 = vmatprep.subr.mxu0 0.0
    %222 = vmatpush1.msra.mxu0 %v128
    %223 = vmatprep.subr.mxu0 0.0
    %224 = vmatpush1.msra.mxu0 %v129
    %225 = vmatprep.subr.mxu0 0.0
    %226 = vmatpush1.msra.mxu0 %v130
    %227 = vmatprep.subr.mxu0 0.0
    %228 = vmatpush1.msra.mxu0 %v131
    %229 = vmatprep.subr.mxu0 0.0
    %230 = vmatpush1.msra.mxu0 %v132
    %231 = vmatprep.subr.mxu0 0.0
    %232 = vmatpush1.msra.mxu0 %v133
    %233 = vmatprep.subr.mxu0 0.0
    %234 = vmatpush1.msra.mxu0 %v134
    %235 = vmatprep.subr.mxu0 0.0
    %236 = vmatpush1.msra.mxu0 %v135
    %237 = vmatprep.subr.mxu0 0.0
    %238 = vmatpush1.msra.mxu0 %v136
    %239 = vmatprep.subr.mxu0 0.0
    %240 = vmatpush1.msra.mxu0 %v137
    %241 = vmatprep.subr.mxu0 0.0
    %242 = vmatpush1.msra.mxu0 %v138
    %243 = vmatprep.subr.mxu0 0.0
    %244 = vmatpush1.msra.mxu0 0.0
    %245 = vmatprep.subr.mxu0 0.0
    %246 = vmatpush1.msra.mxu0 0.0
    %247 = vmatprep.subr.mxu0 0.0
    %248 = vmatpush1.msra.mxu0 0.0
    %249 = vmatprep.subr.mxu0 0.0
    %250 = vmatpush1.msra.mxu0 0.0
    %251 = vmatprep.subr.mxu0 0.0
    %252 = vmatpush1.msra.mxu0 0.0
    %253 = vmatprep.subr.mxu0 0.0
    %254 = vmatpush1.msra.mxu0 0.0
    %255 = vmatprep.subr.mxu0 0.0
    %256 = vmatpush1.msra.mxu0 0.0
    %257 = vmatprep.subr.mxu0 0.0
    %258 = vmatpush1.msra.mxu0 0.0
    %259 = vmatprep.subr.mxu0 0.0
    %260 = vmatpush1.msra.mxu0 0.0
    %261 = vmatprep.subr.mxu0 0.0
    %262 = vmatpush1.msra.mxu0 0.0
    %263 = vmatprep.subr.mxu0 0.0
    %264 = vmatpush1.msra.mxu0 0.0
    %265 = vmatprep.subr.mxu0 0.0
    %266 = vmatpush1.msra.mxu0 0.0
    %267 = vmatprep.subr.mxu0 0.0
    %268 = vmatpush1.msra.mxu0 0.0
    %269 = vmatprep.subr.mxu0 0.0
    %270 = vmatpush1.msra.mxu0 0.0
    %271 = vmatprep.subr.mxu0 0.0
    %272 = vmatpush1.msra.mxu0 0.0
    %273 = vmatprep.subr.mxu0 0.0
    %274 = vmatpush1.msra.mxu0 0.0
    %275 = vmatprep.mubr.f32.mxu0 0.0
    %276 = vmatmul.mubr.f32.gmra.mrb[0].mxu0 %v210
    %v277 = vpop.f32.mrb[0].mxu0
    %v278 = vadd.f32 0.0, %v277
    %v279 = vpop.f32.mrb[0].mxu0
    %280 = vdwg.mxu0
    %v282 = vrot.slane %v278, 6
    %v284 = vadd.f32 %v115, %v282
    %v285 = vtanh.pop %v284
    %v287 = vrot.slane %v285, 2
    %289 = vmatprep.subr.mxu0 0.0
    %290 = vmatpush1.msra.mxu0 %v123
    %291 = vmatprep.subr.mxu0 0.0
    %292 = vmatpush1.msra.mxu0 %v124
    %293 = vmatprep.subr.mxu0 0.0
    %294 = vmatpush1.msra.mxu0 %v125
    %295 = vmatprep.subr.mxu0 0.0
    %296 = vmatpush1.msra.mxu0 %v126
    %297 = vmatprep.subr.mxu0 0.0
    %298 = vmatpush1.msra.mxu0 %v127
    %299 = vmatprep.subr.mxu0 0.0
    %300 = vmatpush1.msra.mxu0 %v128
    %301 = vmatprep.subr.mxu0 0.0
    %302 = vmatpush1.msra.mxu0 %v129
    %303 = vmatprep.subr.mxu0 0.0
    %304 = vmatpush1.msra.mxu0 %v130
    %305 = vmatprep.subr.mxu0 0.0
    %306 = vmatpush1.msra.mxu0 %v131
    %307 = vmatprep.subr.mxu0 0.0
    %308 = vmatpush1.msra.mxu0 %v132
    %309 = vmatprep.subr.mxu0 0.0
    %310 = vmatpush1.msra.mxu0 %v133
    %311 = vmatprep.subr.mxu0 0.0
    %312 = vmatpush1.msra.mxu0 %v134
    %313 = vmatprep.subr.mxu0 0.0
    %314 = vmatpush1.msra.mxu0 %v135
    %315 = vmatprep.subr.mxu0 0.0
    %316 = vmatpush1.msra.mxu0 %v136
    %317 = vmatprep.subr.mxu0 0.0
    %318 = vmatpush1.msra.mxu0 %v137
    %319 = vmatprep.subr.mxu0 0.0
    %320 = vmatpush1.msra.mxu0 %v138
    %321 = vmatprep.subr.mxu0 0.0
    %322 = vmatpush1.msra.mxu0 0.0
    %323 = vmatprep.subr.mxu0 0.0
    %324 = vmatpush1.msra.mxu0 0.0
    %325 = vmatprep.subr.mxu0 0.0
    %326 = vmatpush1.msra.mxu0 0.0
    %327 = vmatprep.subr.mxu0 0.0
    %328 = vmatpush1.msra.mxu0 0.0
    %329 = vmatprep.subr.mxu0 0.0
    %330 = vmatpush1.msra.mxu0 0.0
    %331 = vmatprep.subr.mxu0 0.0
    %332 = vmatpush1.msra.mxu0 0.0
    %333 = vmatprep.subr.mxu0 0.0
    %334 = vmatpush1.msra.mxu0 0.0
    %335 = vmatprep.subr.mxu0 0.0
    %336 = vmatpush1.msra.mxu0 0.0
    %337 = vmatprep.subr.mxu0 0.0
    %338 = vmatpush1.msra.mxu0 0.0
    %339 = vmatprep.subr.mxu0 0.0
    %340 = vmatpush1.msra.mxu0 0.0
    %341 = vmatprep.subr.mxu0 0.0
    %342 = vmatpush1.msra.mxu0 0.0
    %343 = vmatprep.subr.mxu0 0.0
    %344 = vmatpush1.msra.mxu0 0.0
    %345 = vmatprep.subr.mxu0 0.0
    %346 = vmatpush1.msra.mxu0 0.0
    %347 = vmatprep.subr.mxu0 0.0
    %348 = vmatpush1.msra.mxu0 0.0
    %349 = vmatprep.subr.mxu0 0.0
    %350 = vmatpush1.msra.mxu0 0.0
    %351 = vmatprep.subr.mxu0 0.0
    %352 = vmatpush1.msra.mxu0 0.0
    %353 = vmatprep.mubr.f32.mxu0 0.0
    %354 = vmatmul.mubr.f32.gmra.mrb[0].mxu0 %v287
    %v355 = vpop.f32.mrb[0].mxu0
    %v356 = vadd.f32 0.0, %v355
    %v357 = vpop.f32.mrb[0].mxu0
    %358 = vdwg.mxu0
    %v360 = vrot.slane %v356, 4
    %v362 = vadd.f32 %v115, %v360
    %v363 = vtanh.pop %v362
    %v365 = vrot.slane %v363, 4
    %367 = vmatprep.subr.mxu0 0.0
    %368 = vmatpush1.msra.mxu0 %v123
    %369 = vmatprep.subr.mxu0 0.0
    %370 = vmatpush1.msra.mxu0 %v124
    %371 = vmatprep.subr.mxu0 0.0
    %372 = vmatpush1.msra.mxu0 %v125
    %373 = vmatprep.subr.mxu0 0.0
    %374 = vmatpush1.msra.mxu0 %v126
    %375 = vmatprep.subr.mxu0 0.0
    %376 = vmatpush1.msra.mxu0 %v127
    %377 = vmatprep.subr.mxu0 0.0
    %378 = vmatpush1.msra.mxu0 %v128
    %379 = vmatprep.subr.mxu0 0.0
    %380 = vmatpush1.msra.mxu0 %v129
    %381 = vmatprep.subr.mxu0 0.0
    %382 = vmatpush1.msra.mxu0 %v130
    %383 = vmatprep.subr.mxu0 0.0
    %384 = vmatpush1.msra.mxu0 %v131
    %385 = vmatprep.subr.mxu0 0.0
    %386 = vmatpush1.msra.mxu0 %v132
    %387 = vmatprep.subr.mxu0 0.0
    %388 = vmatpush1.msra.mxu0 %v133
    %389 = vmatprep.subr.mxu0 0.0
    %390 = vmatpush1.msra.mxu0 %v134
    %391 = vmatprep.subr.mxu0 0.0
    %392 = vmatpush1.msra.mxu0 %v135
    %393 = vmatprep.subr.mxu0 0.0
    %394 = vmatpush1.msra.mxu0 %v136
    %395 = vmatprep.subr.mxu0 0.0
    %396 = vmatpush1.msra.mxu0 %v137
    %397 = vmatprep.subr.mxu0 0.0
    %398 = vmatpush1.msra.mxu0 %v138
    %399 = vmatprep.subr.mxu0 0.0
    %400 = vmatpush1.msra.mxu0 0.0
    %401 = vmatprep.subr.mxu0 0.0
    %402 = vmatpush1.msra.mxu0 0.0
    %403 = vmatprep.subr.mxu0 0.0
    %404 = vmatpush1.msra.mxu0 0.0
    %405 = vmatprep.subr.mxu0 0.0
    %406 = vmatpush1.msra.mxu0 0.0
    %407 = vmatprep.subr.mxu0 0.0
    %408 = vmatpush1.msra.mxu0 0.0
    %409 = vmatprep.subr.mxu0 0.0
    %410 = vmatpush1.msra.mxu0 0.0
    %411 = vmatprep.subr.mxu0 0.0
    %412 = vmatpush1.msra.mxu0 0.0
    %413 = vmatprep.subr.mxu0 0.0
    %414 = vmatpush1.msra.mxu0 0.0
    %415 = vmatprep.subr.mxu0 0.0
    %416 = vmatpush1.msra.mxu0 0.0
    %417 = vmatprep.subr.mxu0 0.0
    %418 = vmatpush1.msra.mxu0 0.0
    %419 = vmatprep.subr.mxu0 0.0
    %420 = vmatpush1.msra.mxu0 0.0
    %421 = vmatprep.subr.mxu0 0.0
    %422 = vmatpush1.msra.mxu0 0.0
    %423 = vmatprep.subr.mxu0 0.0
    %424 = vmatpush1.msra.mxu0 0.0
    %425 = vmatprep.subr.mxu0 0.0
    %426 = vmatpush1.msra.mxu0 0.0
    %427 = vmatprep.subr.mxu0 0.0
    %428 = vmatpush1.msra.mxu0 0.0
    %429 = vmatprep.subr.mxu0 0.0
    %430 = vmatpush1.msra.mxu0 0.0
    %431 = vmatprep.mubr.f32.mxu0 0.0
    %432 = vmatmul.mubr.f32.gmra.mrb[0].mxu0 %v365
    %v433 = vpop.f32.mrb[0].mxu0
    %v434 = vadd.f32 0.0, %v433
    %v435 = vpop.f32.mrb[0].mxu0
    %436 = vdwg.mxu0
    %v438 = vrot.slane %v434, 2
    %v440 = vadd.f32 %v115, %v438
    %v441 = vtanh.pop %v440
    %v443 = vrot.slane %v441, 6
    %445 = vmatprep.subr.mxu0 0.0
    %446 = vmatpush1.msra.mxu0 %v123
    %447 = vmatprep.subr.mxu0 0.0
    %448 = vmatpush1.msra.mxu0 %v124
    %449 = vmatprep.subr.mxu0 0.0
    %450 = vmatpush1.msra.mxu0 %v125
    %451 = vmatprep.subr.mxu0 0.0
    %452 = vmatpush1.msra.mxu0 %v126
    %453 = vmatprep.subr.mxu0 0.0
    %454 = vmatpush1.msra.mxu0 %v127
    %455 = vmatprep.subr.mxu0 0.0
    %456 = vmatpush1.msra.mxu0 %v128
    %457 = vmatprep.subr.mxu0 0.0
    %458 = vmatpush1.msra.mxu0 %v129
    %459 = vmatprep.subr.mxu0 0.0
    %460 = vmatpush1.msra.mxu0 %v130
    %461 = vmatprep.subr.mxu0 0.0
    %462 = vmatpush1.msra.mxu0 %v131
    %463 = vmatprep.subr.mxu0 0.0
    %464 = vmatpush1.msra.mxu0 %v132
    %465 = vmatprep.subr.mxu0 0.0
    %466 = vmatpush1.msra.mxu0 %v133
    %467 = vmatprep.subr.mxu0 0.0
    %468 = vmatpush1.msra.mxu0 %v134
    %469 = vmatprep.subr.mxu0 0.0
    %470 = vmatpush1.msra.mxu0 %v135
    %471 = vmatprep.subr.mxu0 0.0
    %472 = vmatpush1.msra.mxu0 %v136
    %473 = vmatprep.subr.mxu0 0.0
    %474 = vmatpush1.msra.mxu0 %v137
    %475 = vmatprep.subr.mxu0 0.0
    %476 = vmatpush1.msra.mxu0 %v138
    %477 = vmatprep.subr.mxu0 0.0
    %478 = vmatpush1.msra.mxu0 0.0
    %479 = vmatprep.subr.mxu0 0.0
    %480 = vmatpush1.msra.mxu0 0.0
    %481 = vmatprep.subr.mxu0 0.0
    %482 = vmatpush1.msra.mxu0 0.0
    %483 = vmatprep.subr.mxu0 0.0
    %484 = vmatpush1.msra.mxu0 0.0
    %485 = vmatprep.subr.mxu0 0.0
    %486 = vmatpush1.msra.mxu0 0.0
    %487 = vmatprep.subr.mxu0 0.0
    %488 = vmatpush1.msra.mxu0 0.0
    %489 = vmatprep.subr.mxu0 0.0
    %490 = vmatpush1.msra.mxu0 0.0
    %491 = vmatprep.subr.mxu0 0.0
    %492 = vmatpush1.msra.mxu0 0.0
    %493 = vmatprep.subr.mxu0 0.0
    %494 = vmatpush1.msra.mxu0 0.0
    %495 = vmatprep.subr.mxu0 0.0
    %496 = vmatpush1.msra.mxu0 0.0
    %497 = vmatprep.subr.mxu0 0.0
    %498 = vmatpush1.msra.mxu0 0.0
    %499 = vmatprep.subr.mxu0 0.0
    %500 = vmatpush1.msra.mxu0 0.0
    %501 = vmatprep.subr.mxu0 0.0
    %502 = vmatpush1.msra.mxu0 0.0
    %503 = vmatprep.subr.mxu0 0.0
    %504 = vmatpush1.msra.mxu0 0.0
    %505 = vmatprep.subr.mxu0 0.0
    %506 = vmatpush1.msra.mxu0 0.0
    %507 = vmatprep.subr.mxu0 0.0
    %508 = vmatpush1.msra.mxu0 0.0
    %509 = vmatprep.mubr.f32.mxu0 0.0
    %510 = vmatmul.mubr.f32.gmra.mrb[0].mxu0 %v443
    %v511 = vpop.f32.mrb[0].mxu0
    %v512 = vadd.f32 0.0, %v511
    %v513 = vpop.f32.mrb[0].mxu0
    %514 = vdwg.mxu0
    %v515 = vadd.f32 %v120, %v512
    %v516 = vtanh.pop %v515
    %517 = vmatprep.subr.mxu0 0.0
    %518 = vmatpush1.msra.mxu0 %v123
    %519 = vmatprep.subr.mxu0 0.0
    %520 = vmatpush1.msra.mxu0 %v124
    %521 = vmatprep.subr.mxu0 0.0
    %522 = vmatpush1.msra.mxu0 %v125
    %523 = vmatprep.subr.mxu0 0.0
    %524 = vmatpush1.msra.mxu0 %v126
    %525 = vmatprep.subr.mxu0 0.0
    %526 = vmatpush1.msra.mxu0 %v127
    %527 = vmatprep.subr.mxu0 0.0
    %528 = vmatpush1.msra.mxu0 %v128
    %529 = vmatprep.subr.mxu0 0.0
    %530 = vmatpush1.msra.mxu0 %v129
    %531 = vmatprep.subr.mxu0 0.0
    %532 = vmatpush1.msra.mxu0 %v130
    %533 = vmatprep.subr.mxu0 0.0
    %534 = vmatpush1.msra.mxu0 %v131
    %535 = vmatprep.subr.mxu0 0.0
    %536 = vmatpush1.msra.mxu0 %v132
    %537 = vmatprep.subr.mxu0 0.0
    %538 = vmatpush1.msra.mxu0 %v133
    %539 = vmatprep.subr.mxu0 0.0
    %540 = vmatpush1.msra.mxu0 %v134
    %541 = vmatprep.subr.mxu0 0.0
    %542 = vmatpush1.msra.mxu0 %v135
    %543 = vmatprep.subr.mxu0 0.0
    %544 = vmatpush1.msra.mxu0 %v136
    %545 = vmatprep.subr.mxu0 0.0
    %546 = vmatpush1.msra.mxu0 %v137
    %547 = vmatprep.subr.mxu0 0.0
    %548 = vmatpush1.msra.mxu0 %v138
    %549 = vmatprep.subr.mxu0 0.0
    %550 = vmatpush1.msra.mxu0 0.0
    %551 = vmatprep.subr.mxu0 0.0
    %552 = vmatpush1.msra.mxu0 0.0
    %553 = vmatprep.subr.mxu0 0.0
    %554 = vmatpush1.msra.mxu0 0.0
    %555 = vmatprep.subr.mxu0 0.0
    %556 = vmatpush1.msra.mxu0 0.0
    %557 = vmatprep.subr.mxu0 0.0
    %558 = vmatpush1.msra.mxu0 0.0
    %559 = vmatprep.subr.mxu0 0.0
    %560 = vmatpush1.msra.mxu0 0.0
    %561 = vmatprep.subr.mxu0 0.0
    %562 = vmatpush1.msra.mxu0 0.0
    %563 = vmatprep.subr.mxu0 0.0
    %564 = vmatpush1.msra.mxu0 0.0
    %565 = vmatprep.subr.mxu0 0.0
    %566 = vmatpush1.msra.mxu0 0.0
    %567 = vmatprep.subr.mxu0 0.0
    %568 = vmatpush1.msra.mxu0 0.0
    %569 = vmatprep.subr.mxu0 0.0
    %570 = vmatpush1.msra.mxu0 0.0
    %571 = vmatprep.subr.mxu0 0.0
    %572 = vmatpush1.msra.mxu0 0.0
    %573 = vmatprep.subr.mxu0 0.0
    %574 = vmatpush1.msra.mxu0 0.0
    %575 = vmatprep.subr.mxu0 0.0
    %576 = vmatpush1.msra.mxu0 0.0
    %577 = vmatprep.subr.mxu0 0.0
    %578 = vmatpush1.msra.mxu0 0.0
    %579 = vmatprep.subr.mxu0 0.0
    %580 = vmatpush1.msra.mxu0 0.0
    %581 = vmatprep.mubr.f32.mxu0 0.0
    %582 = vmatmul.mubr.f32.gmra.mrb[0].mxu0 %v516
    %v583 = vpop.f32.mrb[0].mxu0
    %v584 = vadd.f32 0.0, %v583
    %v585 = vpop.f32.mrb[0].mxu0
    %586 = vdwg.mxu0
    %v588 = vrot.slane %v584, 6
    %v590 = vadd.f32 %v120, %v588
    %v591 = vtanh.pop %v590
    %v593 = vrot.slane %v591, 2
    %595 = vmatprep.subr.mxu0 0.0
    %596 = vmatpush1.msra.mxu0 %v123
    %597 = vmatprep.subr.mxu0 0.0
    %598 = vmatpush1.msra.mxu0 %v124
    %599 = vmatprep.subr.mxu0 0.0
    %600 = vmatpush1.msra.mxu0 %v125
    %601 = vmatprep.subr.mxu0 0.0
    %602 = vmatpush1.msra.mxu0 %v126
    %603 = vmatprep.subr.mxu0 0.0
    %604 = vmatpush1.msra.mxu0 %v127
    %605 = vmatprep.subr.mxu0 0.0
    %606 = vmatpush1.msra.mxu0 %v128
    %607 = vmatprep.subr.mxu0 0.0
    %608 = vmatpush1.msra.mxu0 %v129
    %609 = vmatprep.subr.mxu0 0.0
    %610 = vmatpush1.msra.mxu0 %v130
    %611 = vmatprep.subr.mxu0 0.0
    %612 = vmatpush1.msra.mxu0 %v131
    %613 = vmatprep.subr.mxu0 0.0
    %614 = vmatpush1.msra.mxu0 %v132
    %615 = vmatprep.subr.mxu0 0.0
    %616 = vmatpush1.msra.mxu0 %v133
    %617 = vmatprep.subr.mxu0 0.0
    %618 = vmatpush1.msra.mxu0 %v134
    %619 = vmatprep.subr.mxu0 0.0
    %620 = vmatpush1.msra.mxu0 %v135
    %621 = vmatprep.subr.mxu0 0.0
    %622 = vmatpush1.msra.mxu0 %v136
    %623 = vmatprep.subr.mxu0 0.0
    %624 = vmatpush1.msra.mxu0 %v137
    %625 = vmatprep.subr.mxu0 0.0
    %626 = vmatpush1.msra.mxu0 %v138
    %627 = vmatprep.subr.mxu0 0.0
    %628 = vmatpush1.msra.mxu0 0.0
    %629 = vmatprep.subr.mxu0 0.0
    %630 = vmatpush1.msra.mxu0 0.0
    %631 = vmatprep.subr.mxu0 0.0
    %632 = vmatpush1.msra.mxu0 0.0
    %633 = vmatprep.subr.mxu0 0.0
    %634 = vmatpush1.msra.mxu0 0.0
    %635 = vmatprep.subr.mxu0 0.0
    %636 = vmatpush1.msra.mxu0 0.0
    %637 = vmatprep.subr.mxu0 0.0
    %638 = vmatpush1.msra.mxu0 0.0
    %639 = vmatprep.subr.mxu0 0.0
    %640 = vmatpush1.msra.mxu0 0.0
    %641 = vmatprep.subr.mxu0 0.0
    %642 = vmatpush1.msra.mxu0 0.0
    %643 = vmatprep.subr.mxu0 0.0
    %644 = vmatpush1.msra.mxu0 0.0
    %645 = vmatprep.subr.mxu0 0.0
    %646 = vmatpush1.msra.mxu0 0.0
    %647 = vmatprep.subr.mxu0 0.0
    %648 = vmatpush1.msra.mxu0 0.0
    %649 = vmatprep.subr.mxu0 0.0
    %650 = vmatpush1.msra.mxu0 0.0
    %651 = vmatprep.subr.mxu0 0.0
    %652 = vmatpush1.msra.mxu0 0.0
    %653 = vmatprep.subr.mxu0 0.0
    %654 = vmatpush1.msra.mxu0 0.0
    %655 = vmatprep.subr.mxu0 0.0
    %656 = vmatpush1.msra.mxu0 0.0
    %657 = vmatprep.subr.mxu0 0.0
    %658 = vmatpush1.msra.mxu0 0.0
    %659 = vmatprep.mubr.f32.mxu0 0.0
    %660 = vmatmul.mubr.f32.gmra.mrb[0].mxu0 %v593
    %v661 = vpop.f32.mrb[0].mxu0
    %v662 = vadd.f32 0.0, %v661
    %v663 = vpop.f32.mrb[0].mxu0
    %664 = vdwg.mxu0
    %v666 = vrot.slane %v662, 4
    %v668 = vadd.f32 %v120, %v666
    %v669 = vtanh.pop %v668
    %v671 = vrot.slane %v669, 4
    %673 = vmatprep.subr.mxu0 0.0
    %674 = vmatpush1.msra.mxu0 %v123
    %675 = vmatprep.subr.mxu0 0.0
    %676 = vmatpush1.msra.mxu0 %v124
    %677 = vmatprep.subr.mxu0 0.0
    %678 = vmatpush1.msra.mxu0 %v125
    %679 = vmatprep.subr.mxu0 0.0
    %680 = vmatpush1.msra.mxu0 %v126
    %681 = vmatprep.subr.mxu0 0.0
    %682 = vmatpush1.msra.mxu0 %v127
    %683 = vmatprep.subr.mxu0 0.0
    %684 = vmatpush1.msra.mxu0 %v128
    %685 = vmatprep.subr.mxu0 0.0
    %686 = vmatpush1.msra.mxu0 %v129
    %687 = vmatprep.subr.mxu0 0.0
    %688 = vmatpush1.msra.mxu0 %v130
    %689 = vmatprep.subr.mxu0 0.0
    %690 = vmatpush1.msra.mxu0 %v131
    %691 = vmatprep.subr.mxu0 0.0
    %692 = vmatpush1.msra.mxu0 %v132
    %693 = vmatprep.subr.mxu0 0.0
    %694 = vmatpush1.msra.mxu0 %v133
    %695 = vmatprep.subr.mxu0 0.0
    %696 = vmatpush1.msra.mxu0 %v134
    %697 = vmatprep.subr.mxu0 0.0
    %698 = vmatpush1.msra.mxu0 %v135
    %699 = vmatprep.subr.mxu0 0.0
    %700 = vmatpush1.msra.mxu0 %v136
    %701 = vmatprep.subr.mxu0 0.0
    %702 = vmatpush1.msra.mxu0 %v137
    %703 = vmatprep.subr.mxu0 0.0
    %704 = vmatpush1.msra.mxu0 %v138
    %705 = vmatprep.subr.mxu0 0.0
    %706 = vmatpush1.msra.mxu0 0.0
    %707 = vmatprep.subr.mxu0 0.0
    %708 = vmatpush1.msra.mxu0 0.0
    %709 = vmatprep.subr.mxu0 0.0
    %710 = vmatpush1.msra.mxu0 0.0
    %711 = vmatprep.subr.mxu0 0.0
    %712 = vmatpush1.msra.mxu0 0.0
    %713 = vmatprep.subr.mxu0 0.0
    %714 = vmatpush1.msra.mxu0 0.0
    %715 = vmatprep.subr.mxu0 0.0
    %716 = vmatpush1.msra.mxu0 0.0
    %717 = vmatprep.subr.mxu0 0.0
    %718 = vmatpush1.msra.mxu0 0.0
    %719 = vmatprep.subr.mxu0 0.0
    %720 = vmatpush1.msra.mxu0 0.0
    %721 = vmatprep.subr.mxu0 0.0
    %722 = vmatpush1.msra.mxu0 0.0
    %723 = vmatprep.subr.mxu0 0.0
    %724 = vmatpush1.msra.mxu0 0.0
    %725 = vmatprep.subr.mxu0 0.0
    %726 = vmatpush1.msra.mxu0 0.0
    %727 = vmatprep.subr.mxu0 0.0
    %728 = vmatpush1.msra.mxu0 0.0
    %729 = vmatprep.subr.mxu0 0.0
    %730 = vmatpush1.msra.mxu0 0.0
    %731 = vmatprep.subr.mxu0 0.0
    %732 = vmatpush1.msra.mxu0 0.0
    %733 = vmatprep.subr.mxu0 0.0
    %734 = vmatpush1.msra.mxu0 0.0
    %735 = vmatprep.subr.mxu0 0.0
    %736 = vmatpush1.msra.mxu0 0.0
    %737 = vmatprep.mubr.f32.mxu0 0.0
    %738 = vmatmul.mubr.f32.gmra.mrb[0].mxu0 %v671
    %v739 = vpop.f32.mrb[0].mxu0
    %v740 = vadd.f32 0.0, %v739
    %v741 = vpop.f32.mrb[0].mxu0
    %742 = vdwg.mxu0
    %v744 = vrot.slane %v740, 2
    %v746 = vadd.f32 %v120, %v744
    %v747 = vtanh.pop %v746
    %v750 = vunpack.c.l.s4 1966171168
    %v751 = vunpack.c.0.s8 %v750
    %v752 = vlaneseq
    %v753 = vshrl.u32 %v752, 7
    %v754 = vsub.s32 %v751, %v753
    %v755 = vrot.slane %v210, %v754
    %v756 = vcombine.high %v755, %v755
    %v758 = vunpack.c.l.s4 1966171168
    %v759 = vunpack.c.0.s8 %v758
    %v760 = vlaneseq
    %v761 = vshrl.u32 %v760, 7
    %v762 = vsub.s32 %v759, %v761
    %v763 = vrot.slane %v755, %v762
    %v765 = vunpack.c.l.s4 1966171168
    %v766 = vunpack.c.0.s8 %v765
    %v767 = vlaneseq
    %v768 = vshrl.u32 %v767, 7
    %v769 = vsub.s32 %v766, %v768
    %v770 = vrot.slane %v756, %v769
    %v774 = vunpack.c.l.s4 1966171168
    %v775 = vunpack.c.0.s8 %v774
    %v776 = vlaneseq
    %v777 = vshrl.u32 %v776, 7
    %v778 = vsub.s32 %v775, %v777
    %v779 = vrot.slane %v285, %v778
    %v780 = vcombine.high %v779, %v779
    %v782 = vunpack.c.l.s4 1966171168
    %v783 = vunpack.c.0.s8 %v782
    %v784 = vlaneseq
    %v785 = vshrl.u32 %v784, 7
    %v786 = vsub.s32 %v783, %v785
    %v787 = vrot.slane %v779, %v786
    %v789 = vunpack.c.l.s4 1966171168
    %v790 = vunpack.c.0.s8 %v789
    %v791 = vlaneseq
    %v792 = vshrl.u32 %v791, 7
    %v793 = vsub.s32 %v790, %v792
    %v794 = vrot.slane %v780, %v793
    %v795 = vcombine.high %v787, %v787
    %v796 = vcombine.high %v794, %v794
    %v797 = vcombine.high %v363, %v363
    %v799 = vunpack.c.l.s4 1966171168
    %v800 = vunpack.c.0.s8 %v799
    %v801 = vlaneseq
    %v802 = vshrl.u32 %v801, 7
    %v803 = vsub.s32 %v800, %v802
    %v804 = vrot.slane %v797, %v803
    %v805 = vcombine.high %v804, %v804
    %v807 = vunpack.c.l.s4 1966171168
    %v808 = vunpack.c.0.s8 %v807
    %v809 = vlaneseq
    %v810 = vshrl.u32 %v809, 7
    %v811 = vsub.s32 %v808, %v810
    %v812 = vrot.slane %v804, %v811
    %v814 = vunpack.c.l.s4 1966171168
    %v815 = vunpack.c.0.s8 %v814
    %v816 = vlaneseq
    %v817 = vshrl.u32 %v816, 7
    %v818 = vsub.s32 %v815, %v817
    %v819 = vrot.slane %v805, %v818
    %v820 = vcombine.high %v441, %v441
    %v822 = vunpack.c.l.s4 1966171168
    %v823 = vunpack.c.0.s8 %v822
    %v824 = vlaneseq
    %v825 = vshrl.u32 %v824, 7
    %v826 = vsub.s32 %v823, %v825
    %v827 = vrot.slane %v820, %v826
    %v828 = vcombine.high %v827, %v827
    %v830 = vunpack.c.l.s4 1966171168
    %v831 = vunpack.c.0.s8 %v830
    %v832 = vlaneseq
    %v833 = vshrl.u32 %v832, 7
    %v834 = vsub.s32 %v831, %v833
    %v835 = vrot.slane %v827, %v834
    %v837 = vunpack.c.l.s4 1966171168
    %v838 = vunpack.c.0.s8 %v837
    %v839 = vlaneseq
    %v840 = vshrl.u32 %v839, 7
    %v841 = vsub.s32 %v838, %v840
    %v842 = vrot.slane %v828, %v841
    %v843 = vcombine.high %v835, %v835
    %v844 = vcombine.high %v842, %v842
    %v847 = vunpack.c.l.s4 1966171168
    %v848 = vunpack.c.0.s8 %v847
    %v849 = vlaneseq
    %v850 = vshrl.u32 %v849, 7
    %v851 = vsub.s32 %v848, %v850
    %v852 = vrot.slane %v516, %v851
    %v853 = vcombine.high %v852, %v852
    %v855 = vunpack.c.l.s4 1966171168
    %v856 = vunpack.c.0.s8 %v855
    %v857 = vlaneseq
    %v858 = vshrl.u32 %v857, 7
    %v859 = vsub.s32 %v856, %v858
    %v860 = vrot.slane %v852, %v859
    %v862 = vunpack.c.l.s4 1966171168
    %v863 = vunpack.c.0.s8 %v862
    %v864 = vlaneseq
    %v865 = vshrl.u32 %v864, 7
    %v866 = vsub.s32 %v863, %v865
    %v867 = vrot.slane %v853, %v866
    %v869 = vunpack.c.l.s4 1966171168
    %v870 = vunpack.c.0.s8 %v869
    %v871 = vlaneseq
    %v872 = vshrl.u32 %v871, 7
    %v873 = vsub.s32 %v870, %v872
    %v874 = vrot.slane %v591, %v873
    %v875 = vcombine.high %v874, %v874
    %v877 = vunpack.c.l.s4 1966171168
    %v878 = vunpack.c.0.s8 %v877
    %v879 = vlaneseq
    %v880 = vshrl.u32 %v879, 7
    %v881 = vsub.s32 %v878, %v880
    %v882 = vrot.slane %v874, %v881
    %v884 = vunpack.c.l.s4 1966171168
    %v885 = vunpack.c.0.s8 %v884
    %v886 = vlaneseq
    %v887 = vshrl.u32 %v886, 7
    %v888 = vsub.s32 %v885, %v887
    %v889 = vrot.slane %v875, %v888
    %v890 = vcombine.high %v882, %v882
    %v891 = vcombine.high %v889, %v889
    %v892 = vcombine.high %v669, %v669
    %v894 = vunpack.c.l.s4 1966171168
    %v895 = vunpack.c.0.s8 %v894
    %v896 = vlaneseq
    %v897 = vshrl.u32 %v896, 7
    %v898 = vsub.s32 %v895, %v897
    %v899 = vrot.slane %v892, %v898
    %v900 = vcombine.high %v899, %v899
    %v902 = vunpack.c.l.s4 1966171168
    %v903 = vunpack.c.0.s8 %v902
    %v904 = vlaneseq
    %v905 = vshrl.u32 %v904, 7
    %v906 = vsub.s32 %v903, %v905
    %v907 = vrot.slane %v899, %v906
    %v909 = vunpack.c.l.s4 1966171168
    %v910 = vunpack.c.0.s8 %v909
    %v911 = vlaneseq
    %v912 = vshrl.u32 %v911, 7
    %v913 = vsub.s32 %v910, %v912
    %v914 = vrot.slane %v900, %v913
    %v916 = vcombine.high %v747, %v747
    %v918 = vunpack.c.l.s4 1966171168
    %v919 = vunpack.c.0.s8 %v918
    %v920 = vlaneseq
    %v921 = vshrl.u32 %v920, 7
    %v922 = vsub.s32 %v919, %v921
    %v923 = vrot.slane %v916, %v922
    %v924 = vcombine.high %v923, %v923
    %v926 = vunpack.c.l.s4 1966171168
    %v927 = vunpack.c.0.s8 %v926
    %v928 = vlaneseq
    %v929 = vshrl.u32 %v928, 7
    %v930 = vsub.s32 %v927, %v929
    %v931 = vrot.slane %v923, %v930
    %v933 = vunpack.c.l.s4 1966171168
    %v934 = vunpack.c.0.s8 %v933
    %v935 = vlaneseq
    %v936 = vshrl.u32 %v935, 7
    %v937 = vsub.s32 %v934, %v936
    %v938 = vrot.slane %v924, %v937
    %v939 = vcombine.high %v931, %v931
    %v940 = vcombine.high %v938, %v938
    %v941 = vlaneseq
    %v942 = vshrl.u32 %v941, 7
    %v943 = vsub.s32 0, %v942
    %v944 = vrot.slane %v795, %v943
    %v945 = vlaneseq
    %v946 = vshrl.u32 %v945, 7
    %v947 = vsub.s32 0, %v946
    %v948 = vrot.slane %v796, %v947
    %v951 = vlaneseq
    %v952 = vshrl.u32 %v951, 7
    %v953 = vsub.s32 0, %v952
    %v954 = vrot.slane %v812, %v953
    %v955 = vlaneseq
    %v956 = vshrl.u32 %v955, 7
    %v957 = vsub.s32 0, %v956
    %v958 = vrot.slane %v819, %v957
    %v961 = vlaneseq
    %v962 = vshrl.u32 %v961, 7
    %v963 = vsub.s32 0, %v962
    %v964 = vrot.slane %v843, %v963
    %v965 = vlaneseq
    %v966 = vshrl.u32 %v965, 7
    %v967 = vsub.s32 0, %v966
    %v968 = vrot.slane %v844, %v967
    %v971 = vlaneseq
    %v972 = vshrl.u32 %v971, 7
    %v973 = vsub.s32 0, %v972
    %v974 = vrot.slane %v860, %v973
    %v975 = vlaneseq
    %v976 = vshrl.u32 %v975, 7
    %v977 = vsub.s32 0, %v976
    %v978 = vrot.slane %v867, %v977
    %v981 = vlaneseq
    %v982 = vshrl.u32 %v981, 7
    %v983 = vsub.s32 0, %v982
    %v984 = vrot.slane %v890, %v983
    %v985 = vlaneseq
    %v986 = vshrl.u32 %v985, 7
    %v987 = vsub.s32 0, %v986
    %v988 = vrot.slane %v891, %v987
    %v991 = vlaneseq
    %v992 = vshrl.u32 %v991, 7
    %v993 = vsub.s32 0, %v992
    %v994 = vrot.slane %v907, %v993
    %v995 = vlaneseq
    %v996 = vshrl.u32 %v995, 7
    %v997 = vsub.s32 0, %v996
    %v998 = vrot.slane %v914, %v997
    %v1001 = vlaneseq
    %v1002 = vshrl.u32 %v1001, 7
    %v1003 = vsub.s32 0, %v1002
    %v1004 = vrot.slane %v939, %v1003
    %v1005 = vlaneseq
    %v1006 = vshrl.u32 %v1005, 7
    %v1007 = vsub.s32 0, %v1006
    %v1008 = vrot.slane %v940, %v1007
    %vm1011 = vcmask 1040384
    %v1012 = vsel %vm1011, %v763, %v944
    %v1013 = vsel %vm1011, %v770, %v948
    %vm1014 = vcmask 1041408
    %v1015 = vsel %vm1014, %v1012, %v954
    %v1016 = vsel %vm1014, %v1013, %v958
    %vm1017 = vcmask 1042432
    %v1018 = vsel %vm1017, %v1015, %v964
    %v1019 = vsel %vm1017, %v1016, %v968
    %vm1020 = vcmask 1043456
    %v1021 = vsel %vm1020, %v1018, %v974
    %v1022 = vsel %vm1020, %v1019, %v978
    %vm1023 = vcmask 1044480
    %v1024 = vsel %vm1023, %v1021, %v984
    %v1025 = vsel %vm1023, %v1022, %v988
    %vm1026 = vcmask 1045504
    %v1027 = vsel %vm1026, %v1024, %v994
    %v1028 = vsel %vm1026, %v1025, %v998
    %vm1029 = vcmask 1046528
    %v1030 = vsel %vm1029, %v1027, %v1004
    %v1031 = vsel %vm1029, %v1028, %v1008
    %v1032 = vld [vmem:[%s4] sm:$0xff]
    %v1033 = vld [vmem:[%s4 + $0x8] sm:$0xff]
    %v1034 = vld [vmem:[%s4 + $0x10] sm:$0xff]
    %v1035 = vld [vmem:[%s4 + $0x18] sm:$0xff]
    %v1036 = vld [vmem:[%s4 + $0x20] sm:$0xff]
    %v1037 = vld [vmem:[%s4 + $0x28] sm:$0xff]
    %v1038 = vld [vmem:[%s4 + $0x30] sm:$0xff]
    %v1039 = vld [vmem:[%s4 + $0x38] sm:$0xff]
    %v1040 = vld [vmem:[%s4 + $0x40] sm:$0xff]
    %v1041 = vld [vmem:[%s4 + $0x48] sm:$0xff]
    %v1042 = vld [vmem:[%s4 + $0x50] sm:$0xff]
    %v1043 = vld [vmem:[%s4 + $0x58] sm:$0xff]
    %v1044 = vld [vmem:[%s4 + $0x60] sm:$0xff]
    %v1045 = vld [vmem:[%s4 + $0x68] sm:$0xff]
    %v1046 = vld [vmem:[%s4 + $0x70] sm:$0xff]
    %v1047 = vld [vmem:[%s4 + $0x78] sm:$0xff]
    %v1048 = vld [vmem:[%s5] sm:$0x1]
    %v1050 = vlaneseq
    %v1051 = vshrl.u32 %v1050, 7
    %v1052 = vsub.s32 0, %v1051
    %v1053 = vrot.slane %v1048, %v1052
    %1055 = vmatprep.subr.mxu0 0.0
    %1056 = vmatpush1.msra.mxu0 %v1032
    %1057 = vmatprep.subr.mxu0 0.0
    %1058 = vmatpush1.msra.mxu0 %v1033
    %1059 = vmatprep.subr.mxu0 0.0
    %1060 = vmatpush1.msra.mxu0 %v1034
    %1061 = vmatprep.subr.mxu0 0.0
    %1062 = vmatpush1.msra.mxu0 %v1035
    %1063 = vmatprep.subr.mxu0 0.0
    %1064 = vmatpush1.msra.mxu0 %v1036
    %1065 = vmatprep.subr.mxu0 0.0
    %1066 = vmatpush1.msra.mxu0 %v1037
    %1067 = vmatprep.subr.mxu0 0.0
    %1068 = vmatpush1.msra.mxu0 %v1038
    %1069 = vmatprep.subr.mxu0 0.0
    %1070 = vmatpush1.msra.mxu0 %v1039
    %1071 = vmatprep.subr.mxu0 0.0
    %1072 = vmatpush1.msra.mxu0 %v1040
    %1073 = vmatprep.subr.mxu0 0.0
    %1074 = vmatpush1.msra.mxu0 %v1041
    %1075 = vmatprep.subr.mxu0 0.0
    %1076 = vmatpush1.msra.mxu0 %v1042
    %1077 = vmatprep.subr.mxu0 0.0
    %1078 = vmatpush1.msra.mxu0 %v1043
    %1079 = vmatprep.subr.mxu0 0.0
    %1080 = vmatpush1.msra.mxu0 %v1044
    %1081 = vmatprep.subr.mxu0 0.0
    %1082 = vmatpush1.msra.mxu0 %v1045
    %1083 = vmatprep.subr.mxu0 0.0
    %1084 = vmatpush1.msra.mxu0 %v1046
    %1085 = vmatprep.subr.mxu0 0.0
    %1086 = vmatpush1.msra.mxu0 %v1047
    %1087 = vmatprep.subr.mxu0 0.0
    %1088 = vmatpush1.msra.mxu0 0.0
    %1089 = vmatprep.subr.mxu0 0.0
    %1090 = vmatpush1.msra.mxu0 0.0
    %1091 = vmatprep.subr.mxu0 0.0
    %1092 = vmatpush1.msra.mxu0 0.0
    %1093 = vmatprep.subr.mxu0 0.0
    %1094 = vmatpush1.msra.mxu0 0.0
    %1095 = vmatprep.subr.mxu0 0.0
    %1096 = vmatpush1.msra.mxu0 0.0
    %1097 = vmatprep.subr.mxu0 0.0
    %1098 = vmatpush1.msra.mxu0 0.0
    %1099 = vmatprep.subr.mxu0 0.0
    %1100 = vmatpush1.msra.mxu0 0.0
    %1101 = vmatprep.subr.mxu0 0.0
    %1102 = vmatpush1.msra.mxu0 0.0
    %1103 = vmatprep.subr.mxu0 0.0
    %1104 = vmatpush1.msra.mxu0 0.0
    %1105 = vmatprep.subr.mxu0 0.0
    %1106 = vmatpush1.msra.mxu0 0.0
    %1107 = vmatprep.subr.mxu0 0.0
    %1108 = vmatpush1.msra.mxu0 0.0
    %1109 = vmatprep.subr.mxu0 0.0
    %1110 = vmatpush1.msra.mxu0 0.0
    %1111 = vmatprep.subr.mxu0 0.0
    %1112 = vmatpush1.msra.mxu0 0.0
    %1113 = vmatprep.subr.mxu0 0.0
    %1114 = vmatpush1.msra.mxu0 0.0
    %1115 = vmatprep.subr.mxu0 0.0
    %1116 = vmatpush1.msra.mxu0 0.0
    %1117 = vmatprep.subr.mxu0 0.0
    %1118 = vmatpush1.msra.mxu0 0.0
    %1119 = vmatprep.mubr.f32.mxu0 0.0
    %1120 = vmatmul.mubr.f32.gmra.mrb[0].mxu0 %v1030
    %v1121 = vpop.f32.mrb[0].mxu0
    %v1122 = vadd.f32 %v1053, %v1121
    %v1123 = vpop.f32.mrb[0].mxu0
    %1124 = vmatprep.mubr.f32.mxu0 0.0
    %1125 = vmatmul.mubr.f32.gmra.mrb[0].mxu0 %v1031
    %v1126 = vpop.f32.mrb[0].mxu0
    %v1127 = vadd.f32 %v1053, %v1126
    %v1128 = vpop.f32.mrb[0].mxu0
    %1129 = vdwg.mxu0
    %1130 = vst [vmem:[#allocation2] sm:$0xff] %v1122
    %1131 = vst [vmem:[#allocation2 + $0x8] sm:$0xff] %v1127
    %v1132 = vlaneseq
    %v1133 = vand.u32 %v1132, 127
    %vm1134 = vcmp.lt.s32.totalorder %v1133, 64
    %v1135 = vsel %vm1134, %v1122, -1e+30
    %v1136 = vsel %vm1134, %v1127, -1e+30
    %1137 = vmax.xlane.f32.xlu0 %v1135
    %v1138 = vpop.xlane.xlu0 %1137
    %1139 = vmax.xlane.f32.xlu0 %v1136
    %v1140 = vpop.xlane.xlu0 %1139
    %v1141 = vsub.f32 %v1135, %v1138
    %v1142 = vsub.f32 %v1136, %v1140
    %v1143 = vmul.f32 %v1141, 1.442695
    %v1144 = vpow.pop %v1143
    %v1145 = vmul.f32 %v1142, 1.442695
    %v1146 = vpow.pop %v1145
    %1147 = vadd.xlane.f32.xlu0 %v1144
    %v1148 = vpop.xlane.xlu0 %1147
    %1149 = vadd.xlane.f32.xlu0 %v1146
    %v1150 = vpop.xlane.xlu0 %1149
    %v1151 = vlog2.pop %v1148
    %v1152 = vmul.f32 %v1151, 0.6931472
    %v1153 = vlog2.pop %v1150
    %v1154 = vmul.f32 %v1153, 0.6931472
    %v1155 = vadd.f32 %v1152, %v1138
    %v1156 = vadd.f32 %v1154, %v1140
    %v1157 = vld [vmem:[%s6] sm:$0xff]
    %v1158 = vld [vmem:[%s6 + $0x8] sm:$0xff]
    %1159 = vset.pattern.permute.xlu0 0
    %1160 = vperm.xlu0 %1159, %v1157
    %v1161 = vpop.permute.xlu0 %1160
    %1162 = vset.pattern.permute.xlu0 0
    %1163 = vperm.xlu0 %1162, %v1158
    %v1164 = vpop.permute.xlu0 %1163
    %vm1165 = vcmp.eq.s32.totalorder %v1133, %v1161
    %vm1166 = vcmp.eq.s32.totalorder %v1133, %v1164
    %v1167 = vsel %vm1165, %v1135, 0.0
    %v1168 = vsel %vm1166, %v1136, 0.0
    %1169 = vadd.xlane.f32.xlu0 %v1167
    %v1170 = vpop.xlane.xlu0 %1169
    %1171 = vadd.xlane.f32.xlu0 %v1168
    %v1172 = vpop.xlane.xlu0 %1171
    %v1173 = vsub.f32 %v1155, %v1170
    %v1174 = vsub.f32 %v1156, %v1172
    %vm1175 = vcmask 7168
    %v1176 = vsel %vm1175, %v1173, 0.0
    %v1177 = vsel %vm1175, %v1174, 0.0
    %v1178 = vadd.f32 %v1176, %v1177
    %1179 = vadd.xlane.f32.xlu0 %v1178
    %v1180 = vpop.xlane.xlu0 %1179
    %v1181 = vrot.slane %v1180, 4
    %v1182 = vadd.f32 %v1180, %v1181
    %v1183 = vrot.slane %v1182, 2
    %v1184 = vadd.f32 %v1182, %v1183
    %v1185 = vrot.slane %v1184, 1
    %v1186 = vadd.f32 %v1184, %v1185
    %s1187 = vtos %v1186
    %v1188 = vstv %s1187
    %v1189 = vrcp.pop 16.0
    %v1190 = vmul.f32 %v1188, %v1189
    %vm1191 = vcmask 0
    %1192 = vst.msk [vmem:[#allocation4] sm:$0x1] %vm1191, %v1190
    // Predicated region
    $region30: #{vanilla_rnn_forward.1} parent=1 // pred_check
      _
    $region31: #{vanilla_rnn_forward.1} parent=1 // pred_check_branch
      %1194 = sbr.rel (0) target = $region33
    $region32: #{vanilla_rnn_forward.1} parent=1 // pred_region
      %s1196 = ssub.s32 256, 256
      %1197 = vsyncadd [#allocation3], %s1196
      %s1198 = sshll.u32 [#allocation2], 4
      %s1199 = int_to_ptr.vmem [resolvable:$true] %s1198
      %1204 = dma.vmem_to_hbm [thread:$0]  %s1199, 256, %s7, [#allocation3], 128, 128, 8
    $region33: #{vanilla_rnn_forward.1} parent=1 // pred_fallthru
      _
    // Predicated region
    $region34: #{vanilla_rnn_forward.1} parent=1 // pred_check
      _
    $region35: #{vanilla_rnn_forward.1} parent=1 // pred_check_branch
      %1206 = sbr.rel (0) target = $region37
    $region36: #{vanilla_rnn_forward.1} parent=1 // pred_region
      %s1208 = ssub.s32 16, 16
      %1209 = vsyncadd [#allocation5], %s1208
      %s1211 = sshll.u32 [#allocation4], 4
      %s1212 = int_to_ptr.vmem [resolvable:$true] %s1211
      %1214 = dma.vmem_to_hbm [thread:$0]  %s1212, 16, %s8, [#allocation5]
    $region37: #{vanilla_rnn_forward.1} parent=1 // pred_fallthru
      _
    // Predicated region
    $region38: #{vanilla_rnn_forward.1} parent=1 // pred_check
      _
    $region39: #{vanilla_rnn_forward.1} parent=1 // pred_check_branch
      %1216 = sbr.rel (0) target = $region41
    $region40: #{vanilla_rnn_forward.1} parent=1 // pred_region
      %1217 = dma.done [#allocation3], 256
    $region41: #{vanilla_rnn_forward.1} parent=1 // pred_fallthru
      _
    // Predicated region
    $region42: #{vanilla_rnn_forward.1} parent=1 // pred_check
      _
    $region43: #{vanilla_rnn_forward.1} parent=1 // pred_check_branch
      %1219 = sbr.rel (0) target = $region45
    $region44: #{vanilla_rnn_forward.1} parent=1 // pred_region
      %1220 = dma.done [#allocation5], 16
    $region45: #{vanilla_rnn_forward.1} parent=1 // pred_fallthru
      _
    %1221 = vsyncpa [#allocation3], 1
    %1222 = vsyncpa [#allocation5], 1

</llo_original>
